<compile_context>
chip_gen: v5e
topology: v5e:2x2
jax: 0.10.0
libtpu: 0.0.40
codegen_flags: <defaults>
</compile_context>

<pallas_src>
import jax
import jax.numpy as jnp
from jax.experimental import pallas as pl
from jax.experimental.pallas import tpu as pltpu


_LANE = 128
_MIN_PALLAS_BYTES = 256 * 1024        # below this an XLA-level copy is strictly faster
_FALLBACK_VMEM_CAP = 64 << 20         # assume smallest per-core VMEM (v7x) if query fails


# ---------------------------------------------------------------------------
# Path A (primary): direct HBM -> HBM DMA copy.  No VMEM staging, no grid —
# the TensorCore just issues one DMA and waits on its semaphore.
# ---------------------------------------------------------------------------
def _dma_copy_kernel(x_hbm, o_hbm, sem):
    cp = pltpu.make_async_copy(x_hbm, o_hbm, sem)
    cp.start()
    cp.wait()


def _dma_view_shape(x: jax.Array):
    # Present the contiguous buffer as one rectangular, lane-dense slab so the
    # transfer is a single coalesced DMA descriptor (metadata-only reshape).
    n = x.size
    for c in (1024, 512, 256, _LANE):
        if n % c == 0:
            return (n // c, c)
    return x.shape


def _pallas_dma_copy(x: jax.Array) -> jax.Array:
    view = _dma_view_shape(x)
    x2 = x.reshape(view)
    out = pl.pallas_call(
        _dma_copy_kernel,
        out_shape=jax.ShapeDtypeStruct(view, x.dtype),
        in_specs=[pl.BlockSpec(memory_space=pl.ANY)],
        out_specs=pl.BlockSpec(memory_space=pl.ANY),
        scratch_shapes=[pltpu.SemaphoreType.DMA],
        compiler_params=pltpu.CompilerParams(has_side_effects=True),
        cost_estimate=pl.CostEstimate(flops=0, transcendentals=0,
                                      bytes_accessed=2 * x.nbytes),
    )(x2)
    return out.reshape(x.shape)


# ---------------------------------------------------------------------------
# Path B (alternative): VMEM-staged streaming copy with generation-aware tiles.
# ---------------------------------------------------------------------------
def _tiled_copy_kernel(x_ref, o_ref):
    o_ref[...] = x_ref[...]


def _sublane(dtype) -> int:
    # Sublane packing grain: 8 for 32-bit, 16 for 16-bit, 32 for 8-bit dtypes.
    return max(8, 32 // jnp.dtype(dtype).itemsize)


def _vmem_budget():
    """Generation-aware (tile_bytes, vmem_limit_bytes) for the tiled copy."""
    try:
        cap = int(pltpu.get_tpu_info().vmem_capacity_bytes)
    except Exception:
        cap = _FALLBACK_VMEM_CAP
    # 2 input + 2 output double buffers live in scoped VMEM: 4 * tile <= scoped.
    scoped = min(cap // 2, 40 << 20)         # v7x: 32 MiB; v5e/v6e: 40 MiB
    tile_bytes = max(1 << 20, scoped // 4)   # v7x: ~8 MiB tiles; v5e/v6e: ~10 MiB
    vmem_limit = min(max(cap - (8 << 20), scoped), scoped + (8 << 20))
    return tile_bytes, vmem_limit


def _plan_slab(n_elems: int, dtype, tile_bytes: int):
    """Pick a lane-dense (R, C) slab and an evenly-dividing row tile tr."""
    itemsize = jnp.dtype(dtype).itemsize
    for c in (2048, 1024, 512, 256, _LANE):
        if n_elems % c == 0:
            C = c
            break
    else:
        return None  # not lane-divisible; caller falls back to the DMA path
    R = n_elems // C
    sub = _sublane(dtype)
    max_rows = max(sub, (tile_bytes // (C * itemsize)) // sub * sub)
    if R <= max_rows:
        tr = R  # full extent is always a legal block
    else:
        # Prefer a tile that divides R exactly and keeps the sublane grain:
        # every store stays full-width/unmasked and core shards stay balanced.
        tr = None
        n_min = pl.cdiv(R, max_rows)
        for steps in range(n_min, min(n_min + 64, R) + 1):
            if R % steps == 0 and (R // steps) % sub == 0:
                tr = R // steps
                break
        if tr is None:
            tr = max_rows  # ragged-tail fallback (correct, just masked)
    return R, C, tr


def _pallas_tiled_copy(x: jax.Array) -> jax.Array:
    tile_bytes, vmem_limit = _vmem_budget()
    plan = _plan_slab(x.size, x.dtype, tile_bytes)
    if plan is None:
        return _pallas_dma_copy(x)  # irregular element count: use the DMA path
    R, C, tr = plan
    x2 = x.reshape(R, C)
    out = pl.pallas_call(
        _tiled_copy_kernel,
        out_shape=jax.ShapeDtypeStruct((R, C), x.dtype),
        grid=(pl.cdiv(R, tr),),
        in_specs=[pl.BlockSpec((tr, C), lambda i: (i, 0))],
        out_specs=pl.BlockSpec((tr, C), lambda i: (i, 0)),
        # "parallel" vs "arbitrary" barely changes codegen; on v7x the 2-TC
        # concern is instead addressed by the DMA path, which removes the
        # TensorCore store path from the copy entirely.
        compiler_params=pltpu.CompilerParams(
            dimension_semantics=("parallel",),
            vmem_limit_bytes=int(vmem_limit),
        ),
        cost_estimate=pl.CostEstimate(flops=0, transcendentals=0,
                                      bytes_accessed=2 * x2.nbytes),
    )(x2)
    return out.reshape(x.shape)


# ---------------------------------------------------------------------------
# Dispatch + public wrapper.
# ---------------------------------------------------------------------------
def _materialize_copy(x: jax.Array, method: str = "dma") -> jax.Array:
    if x.nbytes < _MIN_PALLAS_BYTES:
        # Launch + pipeline setup dwarf the copy for tiny arrays; a plain XLA
        # copy still honors the "fresh buffer" contract of materialize=True.
        return jnp.copy(x)
    if method == "tiled":
        return _pallas_tiled_copy(x)
    return _pallas_dma_copy(x)


def identity_forward(*inputs, materialize: bool = False, method: str = "dma"):
    """JAX/Pallas equivalent of Identity.forward(*input) -> input (tuple).

    Default (materialize=False): return the inputs unchanged — the zero-cost,
    semantically exact nn.Identity.
    materialize=True: return fresh buffers with identical contents, copied via
    a direct HBM->HBM DMA kernel ("dma", default) or a VMEM-staged streaming
    copy ("tiled"); sub-256 KiB inputs use a plain XLA copy instead.
    """
    if not materialize:
        return tuple(inputs)
    return tuple(_materialize_copy(x, method=method) for x in inputs)


if __name__ == "__main__":
    key = jax.random.PRNGKey(0)
    k1, k2, k3 = jax.random.split(key, 3)

    # Small example inputs (identity accepts anything); z is 1 MiB so it
    # actually exercises the Pallas kernels.
    x = jax.random.normal(k1, (2, 4, 16, 16), dtype=jnp.float32)   # 8 KiB
    y = jax.random.normal(k2, (8, 32), dtype=jnp.float32)          # 1 KiB
    z = jax.random.normal(k3, (256, 1024), dtype=jnp.float32)      # 1 MiB

    # Primary (zero-cost) path — exact nn.Identity semantics.
    outs = jax.block_until_ready(identity_forward(x, y, z))
    assert isinstance(outs, tuple) and len(outs) == 3
    for o, ref in zip(outs, (x, y, z)):
        assert o.shape == ref.shape and o.dtype == ref.dtype
        assert jnp.array_equal(o, ref)

    # Materialized path: x/y take the XLA copy, z runs the HBM->HBM DMA kernel.
    outs_dma = jax.block_until_ready(identity_forward(x, y, z, materialize=True))
    for o, ref in zip(outs_dma, (x, y, z)):
        assert o.shape == ref.shape and o.dtype == ref.dtype
        assert jnp.array_equal(o, ref)

    # Also exercise the VMEM-staged streaming-copy variant once.
    (z_tiled,) = identity_forward(z, materialize=True, method="tiled")
    z_tiled = jax.block_until_ready(z_tiled)
    assert z_tiled.shape == z.shape and z_tiled.dtype == z.dtype
    assert jnp.array_equal(z_tiled, z)

    print("KERNEL_OK")
</pallas_src>

<mosaic_0001>
module attributes {stable_mosaic.version = 11 : i64} {
  func.func @_dma_copy_kernel(%arg0: memref<256x1024xf32, #tpu.memory_space<any>>, %arg1: memref<256x1024xf32, #tpu.memory_space<any>>, %arg2: memref<!tpu.dma_semaphore, #tpu.memory_space<semaphore_mem>>) attributes {dimension_semantics = [], scalar_prefetch = 0 : i64, scratch_operands = 1 : i64, tpu.core_type = #tpu.core_type<tc>} {
    tpu.enqueue_dma source(%arg0 : memref<256x1024xf32, #tpu.memory_space<any>>) target(%arg1 : memref<256x1024xf32, #tpu.memory_space<any>>) target_semaphore(%arg2 : memref<!tpu.dma_semaphore, #tpu.memory_space<semaphore_mem>>)
    tpu.wait_dma2 semaphore(%arg2 : memref<!tpu.dma_semaphore, #tpu.memory_space<semaphore_mem>>) src(%arg0 : memref<256x1024xf32, #tpu.memory_space<any>>) dst(%arg1 : memref<256x1024xf32, #tpu.memory_space<any>>)
    return
  }
}

</mosaic_0001>

<llo_original>
// kernel: tpu_custom_call.1
$region0: #{tpu_custom_call.1}
  #allocation0 [shape = 'u32[]', space=smem, size = 0x4, offset = 0x4, fixed_abs, tag = 'smem constant byte address 0x4 - core index']
  #allocation1 [shape = 'u32[72,128]{1,0:T(1,128)}', space=vmem, size = 0x9000, scoped, tag = 'internal scratch']
  #allocation2 [shape = 's32[1]{0}', space=sflag, size = 0x4, scoped, tag = 'scratch operand']
  #allocation3 [shape = 's32[]', space=sflag, size = 0x4, offset = 0, fixed_abs, tag = 'sflag constant byte address 0x0 - dummy sync flag']
  #allocation4 [shape = 'u32[0]{0}', space=smem, size = 0, offset = 0, fixed_abs, tag = 'smem constant byte address 0x0 - null']
  %s0 = inlined_call_operand.hbm [shape: f32[256,1024], index: 0, kind: input, shape index: {}]
  %s1 = inlined_call_operand.hbm [shape: f32[256,1024], index: 1, kind: output, shape index: {}]
  %s2 = sld [smem:[#allocation0]]
  $region2: #{tpu_custom_call.1} parent=0
    _
  %s4 = ssub.s32 1, %s2
  %s5 = scalar_select 0, %s4, %s2
  %s7 = sshll.u32 1, 14
  %s8 = sxor.u32 4294967295, %s7
  %s10 = sshll.u32 %s0, 4
  %s11 = int_to_ptr.hbm [resolvable:$true] %s10
  %s12 = sshll.u32 %s1, 4
  %s13 = int_to_ptr.hbm [resolvable:$true] %s12
  %16 = dma.general %s11, 32768, %s13, [#allocation2], [#allocation3], [#allocation4], 0, 0
  %s17 = smul.u32 8, 32
  %s18 = smul.u32 %s17, 8
  %s19 = sshll.u32 %s18, 4
  %20 = dma.done [#allocation2], %s19
  %21 = vsyncmov [#allocation2]
  %s22 = vpop.sfrf %21
  %p23 = scmp.eq.s32.totalorder %s22, 0
  %p24 = pneg %p23
  %26 = shalt.err (%p24)

</llo_original>
